<compile_context>
chip_gen: v7x
topology: tpu7x:2x2x1
jax: 0.10.0
libtpu: 0.0.40
codegen_flags: <defaults>
</compile_context>

<pallas_src>
import functools
import math

import jax
import jax.numpy as jnp
from jax.experimental import pallas as pl
from jax.experimental.pallas import tpu as pltpu

LANE = 128


def _round_up(n, m):
    return ((n + m - 1) // m) * m


def _cdiv(a, b):
    return (a + b - 1) // b


# ----------------------------------------------------------------------------
# Kernel: fused 4-layer MLP, ReLU on the first three layers.
# ----------------------------------------------------------------------------
def dqn_kernel(x_ref,
               w1_ref, b1_ref,
               w2_ref, b2_ref,
               w3_ref, b3_ref,
               w4_ref, b4_ref,
               out_ref, *, n_chunks=1):
    """n_chunks > 1 splits the batch tile into independent row-chunks so the
    four strictly-serial matmuls of one chunk interleave with the other's on
    the MXU (a latency win in the small-tile / acting regime; pointless at
    tb >= 512 where each dot already pipelines internally)."""
    tb = x_ref.shape[0]
    rows = tb // n_chunks
    layers = ((w1_ref, b1_ref, True),
              (w2_ref, b2_ref, True),
              (w3_ref, b3_ref, True),
              (w4_ref, b4_ref, False))

    # Independent dependency chains, one per chunk (static row slices).
    chunks = [x_ref[c * rows:(c + 1) * rows, :] for c in range(n_chunks)]
    for w_ref, b_ref, relu in layers:
        w = w_ref[...]          # bf16, MXU-native
        b = b_ref[...]          # (1, out) f32
        nxt = []
        for h in chunks:
            y = jnp.dot(h.astype(jnp.bfloat16), w,
                        preferred_element_type=jnp.float32) + b
            nxt.append(jnp.maximum(y, 0.0) if relu else y)
        chunks = nxt

    # Lane-dense store: last dim of the output slab is 128 (padded action dim),
    # dtype bf16 to halve HBM writeback.
    for c, h in enumerate(chunks):
        out_ref[c * rows:(c + 1) * rows, :] = h.astype(out_ref.dtype)


# ----------------------------------------------------------------------------
# Tiling heuristic
# ----------------------------------------------------------------------------
def _choose_tiling(rows8, tb_max):
    """rows8: batch rounded up to a multiple of 8. Returns (tile_rows, steps)."""
    if rows8 <= tb_max:
        return rows8, 1                      # single grid step for small/medium batch
    steps = _cdiv(rows8, tb_max)
    steps += steps % 2                       # even step count -> both v7x TCs get work
    per = _cdiv(rows8, steps)
    align = 128 if per >= 128 else 8         # MXU-M aligned tiles when big enough
    return _round_up(per, align), steps


# ----------------------------------------------------------------------------
# Wrapper
# ----------------------------------------------------------------------------
def dqn_forward(x, params, action_dim, *, tb_max=512, out_dtype=jnp.bfloat16):
    """Batched DQN forward via a batch-tiled fused Pallas kernel.

    x: (B, state_dim) float32
    params: dict with w1..w4 (in, out) bf16 (w4/b4 lane-padded to 128) and
            b1..b4 (1, out) f32.
    returns: (B, action_dim) float32
    """
    batch, state_dim = x.shape
    hidden = params["w1"].shape[1]
    half = params["w3"].shape[1]
    out_pad = params["w4"].shape[1]          # lane-padded (multiple of 128)

    rows8 = _round_up(max(batch, 1), 8)
    tb, steps = _choose_tiling(rows8, tb_max)
    padded_b = tb * steps
    if padded_b != batch:
        x = jnp.pad(x, ((0, padded_b - batch), (0, 0)))

    # Two interleaved half-tiles only when the tile is small; halves must stay
    # sublane-aligned (multiple of 8 rows), hence tb % 16 == 0.
    n_chunks = 2 if (16 <= tb <= 256 and tb % 16 == 0) else 1

    def resident_spec(arr):
        # Constant-index block: stays VMEM-resident across grid steps. A single
        # buffer suffices (the block never changes), saving ~230 KB of
        # redundant double-buffer VMEM.
        return pl.BlockSpec(arr.shape, lambda i: (0, 0),
                            pipeline_mode=pl.Buffered(1))

    in_specs = [
        pl.BlockSpec((tb, state_dim), lambda i: (i, 0)),   # x: streamed + double-buffered
        resident_spec(params["w1"]), resident_spec(params["b1"]),
        resident_spec(params["w2"]), resident_spec(params["b2"]),
        resident_spec(params["w3"]), resident_spec(params["b3"]),
        resident_spec(params["w4"]), resident_spec(params["b4"]),
    ]
    out_spec = pl.BlockSpec((tb, out_pad), lambda i: (i, 0))

    # Advisory cost estimate: real batch / real action_dim (no padded rows or
    # zero-padded fc4 columns).
    flops = 2 * batch * (state_dim * hidden + hidden * hidden
                         + hidden * half + half * action_dim)
    bytes_accessed = (
        batch * state_dim * 4
        + sum(params[k].size * params[k].dtype.itemsize
              for k in ("w1", "b1", "w2", "b2", "w3", "b3", "w4", "b4"))
        + batch * action_dim * jnp.dtype(out_dtype).itemsize)
    cost = pl.CostEstimate(flops=flops, transcendentals=0,
                           bytes_accessed=bytes_accessed)

    out_padded = pl.pallas_call(
        functools.partial(dqn_kernel, n_chunks=n_chunks),
        out_shape=jax.ShapeDtypeStruct((padded_b, out_pad), out_dtype),
        grid=(steps,),
        in_specs=in_specs,
        out_specs=out_spec,
        compiler_params=pltpu.CompilerParams(
            dimension_semantics=("parallel",)),   # megacore sharding on v7x
        cost_estimate=cost,
    )(x,
      params["w1"], params["b1"],
      params["w2"], params["b2"],
      params["w3"], params["b3"],
      params["w4"], params["b4"])

    # Padded rows/lanes carry garbage -> always slice before use.
    return out_padded[:batch, :action_dim].astype(jnp.float32)


# ----------------------------------------------------------------------------
# Parameter init (matches the PyTorch module's init scheme)
# ----------------------------------------------------------------------------
def xavier_uniform(key, fan_in, fan_out, dtype=jnp.float32):
    """nn.init.xavier_uniform_ on a (out, in) torch weight; returned transposed (in, out)."""
    bound = math.sqrt(6.0 / (fan_in + fan_out))
    w_torch = jax.random.uniform(key, (fan_out, fan_in), dtype, -bound, bound)
    return w_torch.T  # store as (in, out) for x @ W


def torch_linear_bias(key, fan_in, fan_out, dtype=jnp.float32):
    """PyTorch default bias init: U(-1/sqrt(fan_in), 1/sqrt(fan_in)), shaped (1, out)."""
    bound = 1.0 / math.sqrt(fan_in)
    return jax.random.uniform(key, (1, fan_out), dtype, -bound, bound)


def init_dqn_params(key, state_dim, action_dim, hidden_dim=256,
                    weight_dtype=jnp.bfloat16):
    dims = [
        (state_dim, hidden_dim),        # fc1
        (hidden_dim, hidden_dim),       # fc2
        (hidden_dim, hidden_dim // 2),  # fc3
        (hidden_dim // 2, action_dim),  # fc4
    ]
    keys = jax.random.split(key, 2 * len(dims))
    params = {}
    for i, (fi, fo) in enumerate(dims, start=1):
        w = xavier_uniform(keys[2 * (i - 1)], fi, fo)          # (fi, fo) f32
        b = torch_linear_bias(keys[2 * (i - 1) + 1], fi, fo)   # (1, fo) f32
        if i == 4:
            # Pad fc4 output to a full lane width so the kernel's store is
            # lane-dense; padded columns are zeros and sliced off post-kernel.
            fo_pad = _round_up(fo, LANE)
            w = jnp.pad(w, ((0, 0), (0, fo_pad - fo)))
            b = jnp.pad(b, ((0, 0), (0, fo_pad - fo)))
        params[f"w{i}"] = w.astype(weight_dtype)
        params[f"b{i}"] = b.astype(jnp.float32)
    return params


# ----------------------------------------------------------------------------
# Plain-JAX reference (identical mixed precision: bf16 operands, f32 accum,
# bf16 output cast). NOTE: parity with the f32 PyTorch module is ~1e-3
# relative -- fine for Q-value argmax, not bitwise.
# ----------------------------------------------------------------------------
def dqn_reference(x, params, action_dim, out_dtype=jnp.bfloat16):
    def layer(h, w, b, relu):
        y = jnp.dot(h.astype(w.dtype), w,
                    preferred_element_type=jnp.float32) + b
        return jnp.maximum(y, 0.0) if relu else y

    h = layer(x, params["w1"], params["b1"], True)
    h = layer(h, params["w2"], params["b2"], True)
    h = layer(h, params["w3"], params["b3"], True)
    h = layer(h, params["w4"], params["b4"], False)
    return h[:, :action_dim].astype(out_dtype).astype(jnp.float32)


if __name__ == "__main__":
    # Lunar Lander: state_dim=8, action_dim=4, hidden_dim=256 (module defaults).
    state_dim, action_dim, hidden_dim = 8, 4, 256

    key = jax.random.PRNGKey(0)
    k_params, k_x = jax.random.split(key)
    params = init_dqn_params(k_params, state_dim, action_dim, hidden_dim)

    # (batch, tb_max) -> exercised paths:
    #   (8, 512):   tiny acting batch, single grid step, single chain
    #   (128, 512): single grid step, two interleaved half-chunks
    #   (200, 64):  padded batch, streamed multi-step grid (4 even steps)
    configs = [(8, 512), (128, 512), (200, 64)]

    for batch, tb_max in configs:
        kx = jax.random.fold_in(k_x, batch)
        x = jax.random.normal(kx, (batch, state_dim), dtype=jnp.float32)

        out = jax.block_until_ready(
            dqn_forward(x, params, action_dim, tb_max=tb_max))
        ref = dqn_reference(x, params, action_dim)

        assert out.shape == (batch, action_dim)
        assert jnp.allclose(out, ref, atol=1e-2, rtol=1e-2), \
            f"mismatch vs JAX reference (batch={batch}, tb_max={tb_max})"

    print("KERNEL_OK")
</pallas_src>

<mosaic_0001>
module attributes {stable_mosaic.version = 11 : i64} {
  func.func @dqn_kernel(%arg0: i32, %arg1: memref<8x8xf32, #tpu.memory_space<vmem>>, %arg2: memref<8x256xbf16, #tpu.memory_space<vmem>>, %arg3: memref<1x256xf32, #tpu.memory_space<vmem>>, %arg4: memref<256x256xbf16, #tpu.memory_space<vmem>>, %arg5: memref<1x256xf32, #tpu.memory_space<vmem>>, %arg6: memref<256x128xbf16, #tpu.memory_space<vmem>>, %arg7: memref<1x128xf32, #tpu.memory_space<vmem>>, %arg8: memref<128x128xbf16, #tpu.memory_space<vmem>>, %arg9: memref<1x128xf32, #tpu.memory_space<vmem>>, %arg10: memref<8x128xbf16, #tpu.memory_space<vmem>>) attributes {dimension_semantics = [#tpu.dimension_semantics<parallel>], iteration_bounds = array<i64: 1>, scalar_prefetch = 0 : i64, scratch_operands = 0 : i64, tpu.core_type = #tpu.core_type<tc>, window_params = [{transform_indices = @transform_0, window_bounds = array<i64: 8, 8>}, {pipeline_mode = #tpu.pipeline_mode<synchronous>, transform_indices = @transform_1, window_bounds = array<i64: 8, 256>}, {pipeline_mode = #tpu.pipeline_mode<synchronous>, transform_indices = @transform_2, window_bounds = array<i64: 1, 256>}, {pipeline_mode = #tpu.pipeline_mode<synchronous>, transform_indices = @transform_3, window_bounds = array<i64: 256, 256>}, {pipeline_mode = #tpu.pipeline_mode<synchronous>, transform_indices = @transform_4, window_bounds = array<i64: 1, 256>}, {pipeline_mode = #tpu.pipeline_mode<synchronous>, transform_indices = @transform_5, window_bounds = array<i64: 256, 128>}, {pipeline_mode = #tpu.pipeline_mode<synchronous>, transform_indices = @transform_6, window_bounds = array<i64: 1, 128>}, {pipeline_mode = #tpu.pipeline_mode<synchronous>, transform_indices = @transform_7, window_bounds = array<i64: 128, 128>}, {pipeline_mode = #tpu.pipeline_mode<synchronous>, transform_indices = @transform_8, window_bounds = array<i64: 1, 128>}, {transform_indices = @transform_9, window_bounds = array<i64: 8, 128>}]} {
    %c0 = arith.constant 0 : index
    %c0_0 = arith.constant 0 : index
    %0 = vector.load %arg1[%c0, %c0_0] : memref<8x8xf32, #tpu.memory_space<vmem>>, vector<8x8xf32>
    %c0_1 = arith.constant 0 : index
    %c0_2 = arith.constant 0 : index
    %1 = vector.load %arg2[%c0_1, %c0_2] : memref<8x256xbf16, #tpu.memory_space<vmem>>, vector<8x256xbf16>
    %c0_3 = arith.constant 0 : index
    %c0_4 = arith.constant 0 : index
    %2 = vector.load %arg3[%c0_3, %c0_4] : memref<1x256xf32, #tpu.memory_space<vmem>>, vector<1x256xf32>
    %3 = arith.truncf %0 : vector<8x8xf32> to vector<8x8xbf16>
    %cst = arith.constant dense<0.000000e+00> : vector<8x256xf32>
    %4 = tpu.matmul %3, %1, %cst {dimension_numbers = #tpu.dot_dimension_numbers<[1], [0], [0], [1], [0, 0, 1, 1], [], []>} : vector<8x8xbf16>, vector<8x256xbf16>, vector<8x256xf32> -> vector<8x256xf32>
    %5 = vector.broadcast %2 : vector<1x256xf32> to vector<8x256xf32>
    %6 = arith.addf %4, %5 : vector<8x256xf32>
    %cst_5 = arith.constant 0.000000e+00 : f32
    %7 = vector.broadcast %cst_5 : f32 to vector<8x256xf32>
    %8 = arith.maximumf %6, %7 : vector<8x256xf32>
    %c0_6 = arith.constant 0 : index
    %c0_7 = arith.constant 0 : index
    %9 = vector.load %arg4[%c0_6, %c0_7] : memref<256x256xbf16, #tpu.memory_space<vmem>>, vector<256x256xbf16>
    %c0_8 = arith.constant 0 : index
    %c0_9 = arith.constant 0 : index
    %10 = vector.load %arg5[%c0_8, %c0_9] : memref<1x256xf32, #tpu.memory_space<vmem>>, vector<1x256xf32>
    %11 = arith.truncf %8 : vector<8x256xf32> to vector<8x256xbf16>
    %cst_10 = arith.constant dense<0.000000e+00> : vector<8x256xf32>
    %12 = tpu.matmul %11, %9, %cst_10 {dimension_numbers = #tpu.dot_dimension_numbers<[1], [0], [0], [1], [0, 0, 1, 1], [], []>} : vector<8x256xbf16>, vector<256x256xbf16>, vector<8x256xf32> -> vector<8x256xf32>
    %13 = vector.broadcast %10 : vector<1x256xf32> to vector<8x256xf32>
    %14 = arith.addf %12, %13 : vector<8x256xf32>
    %cst_11 = arith.constant 0.000000e+00 : f32
    %15 = vector.broadcast %cst_11 : f32 to vector<8x256xf32>
    %16 = arith.maximumf %14, %15 : vector<8x256xf32>
    %c0_12 = arith.constant 0 : index
    %c0_13 = arith.constant 0 : index
    %17 = vector.load %arg6[%c0_12, %c0_13] : memref<256x128xbf16, #tpu.memory_space<vmem>>, vector<256x128xbf16>
    %c0_14 = arith.constant 0 : index
    %c0_15 = arith.constant 0 : index
    %18 = vector.load %arg7[%c0_14, %c0_15] : memref<1x128xf32, #tpu.memory_space<vmem>>, vector<1x128xf32>
    %19 = arith.truncf %16 : vector<8x256xf32> to vector<8x256xbf16>
    %cst_16 = arith.constant dense<0.000000e+00> : vector<8x128xf32>
    %20 = tpu.matmul %19, %17, %cst_16 {dimension_numbers = #tpu.dot_dimension_numbers<[1], [0], [0], [1], [0, 0, 1, 1], [], []>} : vector<8x256xbf16>, vector<256x128xbf16>, vector<8x128xf32> -> vector<8x128xf32>
    %21 = vector.broadcast %18 : vector<1x128xf32> to vector<8x128xf32>
    %22 = arith.addf %20, %21 : vector<8x128xf32>
    %cst_17 = arith.constant 0.000000e+00 : f32
    %23 = vector.broadcast %cst_17 : f32 to vector<8x128xf32>
    %24 = arith.maximumf %22, %23 : vector<8x128xf32>
    %c0_18 = arith.constant 0 : index
    %c0_19 = arith.constant 0 : index
    %25 = vector.load %arg8[%c0_18, %c0_19] : memref<128x128xbf16, #tpu.memory_space<vmem>>, vector<128x128xbf16>
    %c0_20 = arith.constant 0 : index
    %c0_21 = arith.constant 0 : index
    %26 = vector.load %arg9[%c0_20, %c0_21] : memref<1x128xf32, #tpu.memory_space<vmem>>, vector<1x128xf32>
    %27 = arith.truncf %24 : vector<8x128xf32> to vector<8x128xbf16>
    %cst_22 = arith.constant dense<0.000000e+00> : vector<8x128xf32>
    %28 = tpu.matmul %27, %25, %cst_22 {dimension_numbers = #tpu.dot_dimension_numbers<[1], [0], [0], [1], [0, 0, 1, 1], [], []>} : vector<8x128xbf16>, vector<128x128xbf16>, vector<8x128xf32> -> vector<8x128xf32>
    %29 = vector.broadcast %26 : vector<1x128xf32> to vector<8x128xf32>
    %30 = arith.addf %28, %29 : vector<8x128xf32>
    %31 = arith.truncf %30 : vector<8x128xf32> to vector<8x128xbf16>
    %c0_23 = arith.constant 0 : index
    %c0_24 = arith.constant 0 : index
    %32 = vector.load %arg10[%c0_23, %c0_24] : memref<8x128xbf16, #tpu.memory_space<vmem>>, vector<8x128xbf16>
    tpu.vector_store %arg10[%c0_23, %c0_24], %31 {strides = array<i32>} : memref<8x128xbf16, #tpu.memory_space<vmem>>, vector<8x128xbf16>,
    return
  }
  func.func @transform_0(%arg0: i32) -> (i32, i32) {
    %c0_i32 = arith.constant 0 : i32
    %c0_i32_0 = arith.constant 0 : i32
    return %arg0, %c0_i32 : i32, i32
  }
  func.func @transform_1(%arg0: i32) -> (i32, i32) {
    %c0_i32 = arith.constant 0 : i32
    %c0_i32_0 = arith.constant 0 : i32
    %c0_i32_1 = arith.constant 0 : i32
    return %c0_i32, %c0_i32_0 : i32, i32
  }
  func.func @transform_2(%arg0: i32) -> (i32, i32) {
    %c0_i32 = arith.constant 0 : i32
    %c0_i32_0 = arith.constant 0 : i32
    %c0_i32_1 = arith.constant 0 : i32
    return %c0_i32, %c0_i32_0 : i32, i32
  }
  func.func @transform_3(%arg0: i32) -> (i32, i32) {
    %c0_i32 = arith.constant 0 : i32
    %c0_i32_0 = arith.constant 0 : i32
    %c0_i32_1 = arith.constant 0 : i32
    return %c0_i32, %c0_i32_0 : i32, i32
  }
  func.func @transform_4(%arg0: i32) -> (i32, i32) {
    %c0_i32 = arith.constant 0 : i32
    %c0_i32_0 = arith.constant 0 : i32
    %c0_i32_1 = arith.constant 0 : i32
    return %c0_i32, %c0_i32_0 : i32, i32
  }
  func.func @transform_5(%arg0: i32) -> (i32, i32) {
    %c0_i32 = arith.constant 0 : i32
    %c0_i32_0 = arith.constant 0 : i32
    %c0_i32_1 = arith.constant 0 : i32
    return %c0_i32, %c0_i32_0 : i32, i32
  }
  func.func @transform_6(%arg0: i32) -> (i32, i32) {
    %c0_i32 = arith.constant 0 : i32
    %c0_i32_0 = arith.constant 0 : i32
    %c0_i32_1 = arith.constant 0 : i32
    return %c0_i32, %c0_i32_0 : i32, i32
  }
  func.func @transform_7(%arg0: i32) -> (i32, i32) {
    %c0_i32 = arith.constant 0 : i32
    %c0_i32_0 = arith.constant 0 : i32
    %c0_i32_1 = arith.constant 0 : i32
    return %c0_i32, %c0_i32_0 : i32, i32
  }
  func.func @transform_8(%arg0: i32) -> (i32, i32) {
    %c0_i32 = arith.constant 0 : i32
    %c0_i32_0 = arith.constant 0 : i32
    %c0_i32_1 = arith.constant 0 : i32
    return %c0_i32, %c0_i32_0 : i32, i32
  }
  func.func @transform_9(%arg0: i32) -> (i32, i32) {
    %c0_i32 = arith.constant 0 : i32
    %c0_i32_0 = arith.constant 0 : i32
    return %arg0, %c0_i32 : i32, i32
  }
}

</mosaic_0001>

<llo_original>
// kernel: tpu_custom_call.1
$region0: #{tpu_custom_call.1}
  #allocation0 [shape = 'u32[]', space=smem, size = 0x4, offset = 0x4, fixed_abs, tag = 'smem constant byte address 0x4 - core index']
  #allocation1 [shape = 'u32[144,128]{1,0:T(1,128)}', space=vmem, size = 0x12000, scoped, tag = 'internal scratch']
  %s0 = inlined_call_operand.hbm [shape: f32[8,8], index: 0, kind: input, shape index: {}]
  %s1 = inlined_call_operand.hbm [shape: bf16[8,256], index: 1, kind: input, shape index: {}]
  %s2 = inlined_call_operand.vmem [shape: f32[1,256], index: 2, kind: input, shape index: {}]
  %s3 = inlined_call_operand.hbm [shape: bf16[256,256], index: 3, kind: input, shape index: {}]
  %s4 = inlined_call_operand.vmem [shape: f32[1,256], index: 4, kind: input, shape index: {}]
  %s5 = inlined_call_operand.hbm [shape: bf16[256,128], index: 5, kind: input, shape index: {}]
  %s6 = inlined_call_operand.vmem [shape: f32[1,128], index: 6, kind: input, shape index: {}]
  %s7 = inlined_call_operand.hbm [shape: bf16[128,128], index: 7, kind: input, shape index: {}]
  %s8 = inlined_call_operand.vmem [shape: f32[1,128], index: 8, kind: input, shape index: {}]
  %s9 = inlined_call_operand.hbm [shape: bf16[8,128], index: 9, kind: output, shape index: {}]
  %s10 = sld [smem:[#allocation0]]
  $region66: #{tpu_custom_call.1} parent=0
    _
  %s12 = ssub.s32 1, %s10
  %s13 = scalar_select 0, %s12, %s10
  $region1: #{tpu_custom_call.1} parent=0
    #allocation2 [shape = 'u8[4096]{0}', space=vmem, size = 0x1000, scoped, tag = 'input window, operand 0, single buffered']
    #allocation3 [shape = 's32[1]{0}', space=sflag, size = 0x4, scoped, tag = 'scoped memory for tpu_custom_call.1']
    #allocation4 [shape = 's32[1]{0}', space=sflag, size = 0x4, scoped, tag = 'scoped memory for tpu_custom_call.1']
    #allocation5 [shape = 'u8[4096]{0}', space=vmem, size = 0x1000, scoped, tag = 'input window, operand 1, single buffered']
    #allocation6 [shape = 's32[1]{0}', space=sflag, size = 0x4, scoped, tag = 'scoped memory for tpu_custom_call.1']
    #allocation7 [shape = 'u8[131072]{0}', space=vmem, size = 0x20000, scoped, tag = 'input window, operand 3, single buffered']
    #allocation8 [shape = 'u8[65536]{0}', space=vmem, size = 0x10000, scoped, tag = 'input window, operand 5, single buffered']
    #allocation9 [shape = 's32[1]{0}', space=sflag, size = 0x4, scoped, tag = 'scoped memory for tpu_custom_call.1']
    #allocation10 [shape = 'u8[32768]{0}', space=vmem, size = 0x8000, scoped, tag = 'input window, operand 7, single buffered']
    #allocation11 [shape = 'u8[2048]{0}', space=vmem, size = 0x800, scoped, tag = 'output window, operand 0, single buffered']
    %14 = vsyncpa [#allocation3], 0
    %15 = vsyncpa [#allocation6], 0
    %16 = vsyncpa [#allocation9], 0
    %17 = vsyncpa [#allocation4], 0
    // Predicated region
    $region2: #{tpu_custom_call.1} parent=1 // pred_check
      _
    $region3: #{tpu_custom_call.1} parent=1 // pred_check_branch
      %19 = sbr.rel (0) target = $region5
    $region4: #{tpu_custom_call.1} parent=1 // pred_region
      %s21 = ssub.s32 128, 128
      %22 = vsyncadd [#allocation3], %s21
      %s24 = sshll.u32 [#allocation2], 4
      %s25 = int_to_ptr.vmem [resolvable:$true] %s24
      %27 = dma.hbm_to_vmem [thread:$0]  %s0, 128, %s25, [#allocation3]
    $region5: #{tpu_custom_call.1} parent=1 // pred_fallthru
      _
    // Predicated region
    $region6: #{tpu_custom_call.1} parent=1 // pred_check
      _
    $region7: #{tpu_custom_call.1} parent=1 // pred_check_branch
      %29 = sbr.rel (0) target = $region9
    $region8: #{tpu_custom_call.1} parent=1 // pred_region
      %s31 = ssub.s32 128, 128
      %32 = vsyncadd [#allocation6], %s31
      %s34 = sshll.u32 [#allocation5], 4
      %s35 = int_to_ptr.vmem [resolvable:$true] %s34
      %37 = dma.hbm_to_vmem [thread:$0]  %s1, 128, %s35, [#allocation6]
    $region9: #{tpu_custom_call.1} parent=1 // pred_fallthru
      _
    // Predicated region
    $region10: #{tpu_custom_call.1} parent=1 // pred_check
      _
    $region11: #{tpu_custom_call.1} parent=1 // pred_check_branch
      %39 = sbr.rel (0) target = $region13
    $region12: #{tpu_custom_call.1} parent=1 // pred_region
      _
    $region13: #{tpu_custom_call.1} parent=1 // pred_fallthru
      _
    // Predicated region
    $region14: #{tpu_custom_call.1} parent=1 // pred_check
      _
    $region15: #{tpu_custom_call.1} parent=1 // pred_check_branch
      %41 = sbr.rel (0) target = $region17
    $region16: #{tpu_custom_call.1} parent=1 // pred_region
      %s43 = ssub.s32 4096, 4096
      %44 = vsyncadd [#allocation6], %s43
      %s45 = sshll.u32 [#allocation7], 4
      %s46 = int_to_ptr.vmem [resolvable:$true] %s45
      %51 = dma.hbm_to_vmem [thread:$0]  %s3, 4096, %s46, [#allocation6], 128, 128, 8
    $region17: #{tpu_custom_call.1} parent=1 // pred_fallthru
      _
    // Predicated region
    $region18: #{tpu_custom_call.1} parent=1 // pred_check
      _
    $region19: #{tpu_custom_call.1} parent=1 // pred_check_branch
      %53 = sbr.rel (0) target = $region21
    $region20: #{tpu_custom_call.1} parent=1 // pred_region
      _
    $region21: #{tpu_custom_call.1} parent=1 // pred_fallthru
      _
    // Predicated region
    $region22: #{tpu_custom_call.1} parent=1 // pred_check
      _
    $region23: #{tpu_custom_call.1} parent=1 // pred_check_branch
      %55 = sbr.rel (0) target = $region25
    $region24: #{tpu_custom_call.1} parent=1 // pred_region
      %s57 = ssub.s32 2048, 2048
      %58 = vsyncadd [#allocation9], %s57
      %s59 = sshll.u32 [#allocation8], 4
      %s60 = int_to_ptr.vmem [resolvable:$true] %s59
      %65 = dma.hbm_to_vmem [thread:$0]  %s5, 2048, %s60, [#allocation9], 64, 64, 4
    $region25: #{tpu_custom_call.1} parent=1 // pred_fallthru
      _
    // Predicated region
    $region26: #{tpu_custom_call.1} parent=1 // pred_check
      _
    $region27: #{tpu_custom_call.1} parent=1 // pred_check_branch
      %67 = sbr.rel (0) target = $region29
    $region28: #{tpu_custom_call.1} parent=1 // pred_region
      _
    $region29: #{tpu_custom_call.1} parent=1 // pred_fallthru
      _
    // Predicated region
    $region30: #{tpu_custom_call.1} parent=1 // pred_check
      _
    $region31: #{tpu_custom_call.1} parent=1 // pred_check_branch
      %69 = sbr.rel (0) target = $region33
    $region32: #{tpu_custom_call.1} parent=1 // pred_region
      %s71 = ssub.s32 1024, 1024
      %72 = vsyncadd [#allocation9], %s71
      %s73 = sshll.u32 [#allocation10], 4
      %s74 = int_to_ptr.vmem [resolvable:$true] %s73
      %79 = dma.hbm_to_vmem [thread:$0]  %s7, 1024, %s74, [#allocation9], 64, 64, 4
    $region33: #{tpu_custom_call.1} parent=1 // pred_fallthru
      _
    // Predicated region
    $region34: #{tpu_custom_call.1} parent=1 // pred_check
      _
    $region35: #{tpu_custom_call.1} parent=1 // pred_check_branch
      %81 = sbr.rel (0) target = $region37
    $region36: #{tpu_custom_call.1} parent=1 // pred_region
      _
    $region37: #{tpu_custom_call.1} parent=1 // pred_fallthru
      _
    // Predicated region
    $region38: #{tpu_custom_call.1} parent=1 // pred_check
      _
    $region39: #{tpu_custom_call.1} parent=1 // pred_check_branch
      %83 = sbr.rel (0) target = $region41
    $region40: #{tpu_custom_call.1} parent=1 // pred_region
      %84 = dma.done [#allocation3], 128
    $region41: #{tpu_custom_call.1} parent=1 // pred_fallthru
      _
    // Predicated region
    $region42: #{tpu_custom_call.1} parent=1 // pred_check
      _
    $region43: #{tpu_custom_call.1} parent=1 // pred_check_branch
      %86 = sbr.rel (0) target = $region45
    $region44: #{tpu_custom_call.1} parent=1 // pred_region
      %87 = dma.done [#allocation6], 128
    $region45: #{tpu_custom_call.1} parent=1 // pred_fallthru
      _
    // Predicated region
    $region46: #{tpu_custom_call.1} parent=1 // pred_check
      _
    $region47: #{tpu_custom_call.1} parent=1 // pred_check_branch
      %89 = sbr.rel (0) target = $region49
    $region48: #{tpu_custom_call.1} parent=1 // pred_region
      %90 = dma.done [#allocation6], 4096
    $region49: #{tpu_custom_call.1} parent=1 // pred_fallthru
      _
    // Predicated region
    $region50: #{tpu_custom_call.1} parent=1 // pred_check
      _
    $region51: #{tpu_custom_call.1} parent=1 // pred_check_branch
      %92 = sbr.rel (0) target = $region53
    $region52: #{tpu_custom_call.1} parent=1 // pred_region
      %93 = dma.done [#allocation9], 2048
    $region53: #{tpu_custom_call.1} parent=1 // pred_fallthru
      _
    // Predicated region
    $region54: #{tpu_custom_call.1} parent=1 // pred_check
      _
    $region55: #{tpu_custom_call.1} parent=1 // pred_check_branch
      %95 = sbr.rel (0) target = $region57
    $region56: #{tpu_custom_call.1} parent=1 // pred_region
      %96 = dma.done [#allocation9], 1024
    $region57: #{tpu_custom_call.1} parent=1 // pred_fallthru
      _
    %v98 = vld [vmem:[#allocation2] sm:$0xff]
    %v99 = vld [vmem:[#allocation5] sm:$0xff]
    %v100 = vld [vmem:[%s2] sm:$0x3]
    %v101 = vpack.c.bf16 %v98, %v98
    %v103 = vlaneseq
    %v104 = vshrl.u32 %v103, 7
    %v105 = vsub.s32 0, %v104
    %v106 = vrot.slane %v100, %v105
    %v107 = vlaneseq
    %v108 = vshrl.u32 %v107, 7
    %v109 = vsub.s32 1, %v108
    %v110 = vrot.slane %v100, %v109
    %v114 = vunpack.c.l.b16 %v99
    %v115 = vunpack.c.h.b16 %v99
    %v116 = vpack.c.b16 %v114, %v114
    %v117 = vpack.c.b16 %v115, %v115
    %vm118 = vcmask 64512
    %v120 = vsel %vm118, %v101, 0
    %vm122 = vcmask 1043456
    %v124 = vsel %vm122, %v116, 0
    %v127 = vsel %vm122, %v117, 0
    %129 = vmatprep.subr.bf16.mxu0 %v127
    %130 = vmatpush1.bf16.msra.mxu0 %v124
    %131 = vmatprep.subr.bf16.mxu0 0
    %132 = vmatpush1.bf16.msra.mxu0 0
    %133 = vmatprep.subr.bf16.mxu0 0
    %134 = vmatpush1.bf16.msra.mxu0 0
    %135 = vmatprep.subr.bf16.mxu0 0
    %136 = vmatpush1.bf16.msra.mxu0 0
    %137 = vmatprep.subr.bf16.mxu0 0
    %138 = vmatpush1.bf16.msra.mxu0 0
    %139 = vmatprep.subr.bf16.mxu0 0
    %140 = vmatpush1.bf16.msra.mxu0 0
    %141 = vmatprep.subr.bf16.mxu0 0
    %142 = vmatpush1.bf16.msra.mxu0 0
    %143 = vmatprep.subr.bf16.mxu0 0
    %144 = vmatpush1.bf16.msra.mxu0 0
    %145 = vmatprep.subr.bf16.mxu0 0
    %146 = vmatpush1.bf16.msra.mxu0 0
    %147 = vmatprep.subr.bf16.mxu0 0
    %148 = vmatpush1.bf16.msra.mxu0 0
    %149 = vmatprep.subr.bf16.mxu0 0
    %150 = vmatpush1.bf16.msra.mxu0 0
    %151 = vmatprep.subr.bf16.mxu0 0
    %152 = vmatpush1.bf16.msra.mxu0 0
    %153 = vmatprep.subr.bf16.mxu0 0
    %154 = vmatpush1.bf16.msra.mxu0 0
    %155 = vmatprep.subr.bf16.mxu0 0
    %156 = vmatpush1.bf16.msra.mxu0 0
    %157 = vmatprep.subr.bf16.mxu0 0
    %158 = vmatpush1.bf16.msra.mxu0 0
    %159 = vmatprep.subr.bf16.mxu0 0
    %160 = vmatpush1.bf16.msra.mxu0 0
    %161 = vmatprep.mubr.bf16.mxu0 0
    %162 = vmatmul.mubr.bf16.gmra.mrb[0].mxu0 %v120
    %v163 = vpop.f32.mrb[0].mxu0
    %v164 = vadd.f32 %v106, %v163
    %v165 = vpop.f32.mrb[0].mxu0
    %v166 = vadd.f32 %v110, %v165
    %v167 = vpop.f32.mrb[0].mxu0
    %v168 = vpop.f32.mrb[0].mxu0
    %169 = vdwg.mxu0
    %v170 = vmax.f32 %v164, 0.0
    %v171 = vmax.f32 %v166, 0.0
    %v172 = vld [vmem:[#allocation7] sm:$0xff]
    %v173 = vld [vmem:[#allocation7 + $0x8] sm:$0xff]
    %v174 = vld [vmem:[#allocation7 + $0x10] sm:$0xff]
    %v175 = vld [vmem:[#allocation7 + $0x18] sm:$0xff]
    %v176 = vld [vmem:[#allocation7 + $0x20] sm:$0xff]
    %v177 = vld [vmem:[#allocation7 + $0x28] sm:$0xff]
    %v178 = vld [vmem:[#allocation7 + $0x30] sm:$0xff]
    %v179 = vld [vmem:[#allocation7 + $0x38] sm:$0xff]
    %v180 = vld [vmem:[#allocation7 + $0x40] sm:$0xff]
    %v181 = vld [vmem:[#allocation7 + $0x48] sm:$0xff]
    %v182 = vld [vmem:[#allocation7 + $0x50] sm:$0xff]
    %v183 = vld [vmem:[#allocation7 + $0x58] sm:$0xff]
    %v184 = vld [vmem:[#allocation7 + $0x60] sm:$0xff]
    %v185 = vld [vmem:[#allocation7 + $0x68] sm:$0xff]
    %v186 = vld [vmem:[#allocation7 + $0x70] sm:$0xff]
    %v187 = vld [vmem:[#allocation7 + $0x78] sm:$0xff]
    %v188 = vld [vmem:[#allocation7 + $0x80] sm:$0xff]
    %v189 = vld [vmem:[#allocation7 + $0x88] sm:$0xff]
    %v190 = vld [vmem:[#allocation7 + $0x90] sm:$0xff]
    %v191 = vld [vmem:[#allocation7 + $0x98] sm:$0xff]
    %v192 = vld [vmem:[#allocation7 + $0xa0] sm:$0xff]
    %v193 = vld [vmem:[#allocation7 + $0xa8] sm:$0xff]
    %v194 = vld [vmem:[#allocation7 + $0xb0] sm:$0xff]
    %v195 = vld [vmem:[#allocation7 + $0xb8] sm:$0xff]
    %v196 = vld [vmem:[#allocation7 + $0xc0] sm:$0xff]
    %v197 = vld [vmem:[#allocation7 + $0xc8] sm:$0xff]
    %v198 = vld [vmem:[#allocation7 + $0xd0] sm:$0xff]
    %v199 = vld [vmem:[#allocation7 + $0xd8] sm:$0xff]
    %v200 = vld [vmem:[#allocation7 + $0xe0] sm:$0xff]
    %v201 = vld [vmem:[#allocation7 + $0xe8] sm:$0xff]
    %v202 = vld [vmem:[#allocation7 + $0xf0] sm:$0xff]
    %v203 = vld [vmem:[#allocation7 + $0xf8] sm:$0xff]
    %v204 = vld [vmem:[%s4] sm:$0x3]
    %v205 = vpack.c.bf16 %v170, %v170
    %v206 = vpack.c.bf16 %v171, %v171
    %v208 = vlaneseq
    %v209 = vshrl.u32 %v208, 7
    %v210 = vsub.s32 0, %v209
    %v211 = vrot.slane %v204, %v210
    %v212 = vlaneseq
    %v213 = vshrl.u32 %v212, 7
    %v214 = vsub.s32 1, %v213
    %v215 = vrot.slane %v204, %v214
    %v250 = vunpack.c.l.b16 %v172
    %v251 = vunpack.c.h.b16 %v172
    %v252 = vunpack.c.l.b16 %v173
    %v253 = vunpack.c.h.b16 %v173
    %v254 = vunpack.c.l.b16 %v174
    %v255 = vunpack.c.h.b16 %v174
    %v256 = vunpack.c.l.b16 %v175
    %v257 = vunpack.c.h.b16 %v175
    %v258 = vunpack.c.l.b16 %v176
    %v259 = vunpack.c.h.b16 %v176
    %v260 = vunpack.c.l.b16 %v177
    %v261 = vunpack.c.h.b16 %v177
    %v262 = vunpack.c.l.b16 %v178
    %v263 = vunpack.c.h.b16 %v178
    %v264 = vunpack.c.l.b16 %v179
    %v265 = vunpack.c.h.b16 %v179
    %v266 = vunpack.c.l.b16 %v180
    %v267 = vunpack.c.h.b16 %v180
    %v268 = vunpack.c.l.b16 %v181
    %v269 = vunpack.c.h.b16 %v181
    %v270 = vunpack.c.l.b16 %v182
    %v271 = vunpack.c.h.b16 %v182
    %v272 = vunpack.c.l.b16 %v183
    %v273 = vunpack.c.h.b16 %v183
    %v274 = vunpack.c.l.b16 %v184
    %v275 = vunpack.c.h.b16 %v184
    %v276 = vunpack.c.l.b16 %v185
    %v277 = vunpack.c.h.b16 %v185
    %v278 = vunpack.c.l.b16 %v186
    %v279 = vunpack.c.h.b16 %v186
    %v280 = vunpack.c.l.b16 %v187
    %v281 = vunpack.c.h.b16 %v187
    %v282 = vunpack.c.l.b16 %v188
    %v283 = vunpack.c.h.b16 %v188
    %v284 = vunpack.c.l.b16 %v189
    %v285 = vunpack.c.h.b16 %v189
    %v286 = vunpack.c.l.b16 %v190
    %v287 = vunpack.c.h.b16 %v190
    %v288 = vunpack.c.l.b16 %v191
    %v289 = vunpack.c.h.b16 %v191
    %v290 = vunpack.c.l.b16 %v192
    %v291 = vunpack.c.h.b16 %v192
    %v292 = vunpack.c.l.b16 %v193
    %v293 = vunpack.c.h.b16 %v193
    %v294 = vunpack.c.l.b16 %v194
    %v295 = vunpack.c.h.b16 %v194
    %v296 = vunpack.c.l.b16 %v195
    %v297 = vunpack.c.h.b16 %v195
    %v298 = vunpack.c.l.b16 %v196
    %v299 = vunpack.c.h.b16 %v196
    %v300 = vunpack.c.l.b16 %v197
    %v301 = vunpack.c.h.b16 %v197
    %v302 = vunpack.c.l.b16 %v198
    %v303 = vunpack.c.h.b16 %v198
    %v304 = vunpack.c.l.b16 %v199
    %v305 = vunpack.c.h.b16 %v199
    %v306 = vunpack.c.l.b16 %v200
    %v307 = vunpack.c.h.b16 %v200
    %v308 = vunpack.c.l.b16 %v201
    %v309 = vunpack.c.h.b16 %v201
    %v310 = vunpack.c.l.b16 %v202
    %v311 = vunpack.c.h.b16 %v202
    %v312 = vunpack.c.l.b16 %v203
    %v313 = vunpack.c.h.b16 %v203
    %v314 = vpack.c.b16 %v252, %v250
    %v315 = vpack.c.b16 %v253, %v251
    %v316 = vpack.c.b16 %v256, %v254
    %v317 = vpack.c.b16 %v257, %v255
    %v318 = vpack.c.b16 %v260, %v258
    %v319 = vpack.c.b16 %v261, %v259
    %v320 = vpack.c.b16 %v264, %v262
    %v321 = vpack.c.b16 %v265, %v263
    %v322 = vpack.c.b16 %v268, %v266
    %v323 = vpack.c.b16 %v269, %v267
    %v324 = vpack.c.b16 %v272, %v270
    %v325 = vpack.c.b16 %v273, %v271
    %v326 = vpack.c.b16 %v276, %v274
    %v327 = vpack.c.b16 %v277, %v275
    %v328 = vpack.c.b16 %v280, %v278
    %v329 = vpack.c.b16 %v281, %v279
    %v330 = vpack.c.b16 %v284, %v282
    %v331 = vpack.c.b16 %v285, %v283
    %v332 = vpack.c.b16 %v288, %v286
    %v333 = vpack.c.b16 %v289, %v287
    %v334 = vpack.c.b16 %v292, %v290
    %v335 = vpack.c.b16 %v293, %v291
    %v336 = vpack.c.b16 %v296, %v294
    %v337 = vpack.c.b16 %v297, %v295
    %v338 = vpack.c.b16 %v300, %v298
    %v339 = vpack.c.b16 %v301, %v299
    %v340 = vpack.c.b16 %v304, %v302
    %v341 = vpack.c.b16 %v305, %v303
    %v342 = vpack.c.b16 %v308, %v306
    %v343 = vpack.c.b16 %v309, %v307
    %v344 = vpack.c.b16 %v312, %v310
    %v345 = vpack.c.b16 %v313, %v311
    %378 = vmatprep.subr.bf16.mxu0 %v315
    %379 = vmatpush1.bf16.msra.mxu0 %v314
    %380 = vmatprep.subr.bf16.mxu0 %v317
    %381 = vmatpush1.bf16.msra.mxu0 %v316
    %382 = vmatprep.subr.bf16.mxu0 %v319
    %383 = vmatpush1.bf16.msra.mxu0 %v318
    %384 = vmatprep.subr.bf16.mxu0 %v321
    %385 = vmatpush1.bf16.msra.mxu0 %v320
    %386 = vmatprep.subr.bf16.mxu0 %v323
    %387 = vmatpush1.bf16.msra.mxu0 %v322
    %388 = vmatprep.subr.bf16.mxu0 %v325
    %389 = vmatpush1.bf16.msra.mxu0 %v324
    %390 = vmatprep.subr.bf16.mxu0 %v327
    %391 = vmatpush1.bf16.msra.mxu0 %v326
    %392 = vmatprep.subr.bf16.mxu0 %v329
    %393 = vmatpush1.bf16.msra.mxu0 %v328
    %394 = vmatprep.subr.bf16.mxu0 %v331
    %395 = vmatpush1.bf16.msra.mxu0 %v330
    %396 = vmatprep.subr.bf16.mxu0 %v333
    %397 = vmatpush1.bf16.msra.mxu0 %v332
    %398 = vmatprep.subr.bf16.mxu0 %v335
    %399 = vmatpush1.bf16.msra.mxu0 %v334
    %400 = vmatprep.subr.bf16.mxu0 %v337
    %401 = vmatpush1.bf16.msra.mxu0 %v336
    %402 = vmatprep.subr.bf16.mxu0 %v339
    %403 = vmatpush1.bf16.msra.mxu0 %v338
    %404 = vmatprep.subr.bf16.mxu0 %v341
    %405 = vmatpush1.bf16.msra.mxu0 %v340
    %406 = vmatprep.subr.bf16.mxu0 %v343
    %407 = vmatpush1.bf16.msra.mxu0 %v342
    %408 = vmatprep.subr.bf16.mxu0 %v345
    %409 = vmatpush1.bf16.msra.mxu0 %v344
    %410 = vmatprep.mubr.bf16.mxu0 %v206
    %411 = vmatmul.mubr.bf16.gmra.mrb[0].mxu0 %v205
    %v412 = vpop.f32.mrb[0].mxu0
    %v413 = vadd.f32 %v211, %v412
    %v414 = vpop.f32.mrb[0].mxu0
    %v415 = vadd.f32 %v215, %v414
    %v416 = vpop.f32.mrb[0].mxu0
    %v417 = vpop.f32.mrb[0].mxu0
    %418 = vdwg.mxu0
    %v419 = vmax.f32 %v413, 0.0
    %v420 = vmax.f32 %v415, 0.0
    %v421 = vld [vmem:[#allocation8] sm:$0xf]
    %v422 = vld [vmem:[#allocation8 + $0x4] sm:$0xf]
    %v423 = vld [vmem:[#allocation8 + $0x8] sm:$0xf]
    %v424 = vld [vmem:[#allocation8 + $0xc] sm:$0xf]
    %v425 = vld [vmem:[#allocation8 + $0x10] sm:$0xf]
    %v426 = vld [vmem:[#allocation8 + $0x14] sm:$0xf]
    %v427 = vld [vmem:[#allocation8 + $0x18] sm:$0xf]
    %v428 = vld [vmem:[#allocation8 + $0x1c] sm:$0xf]
    %v429 = vld [vmem:[#allocation8 + $0x20] sm:$0xf]
    %v430 = vld [vmem:[#allocation8 + $0x24] sm:$0xf]
    %v431 = vld [vmem:[#allocation8 + $0x28] sm:$0xf]
    %v432 = vld [vmem:[#allocation8 + $0x2c] sm:$0xf]
    %v433 = vld [vmem:[#allocation8 + $0x30] sm:$0xf]
    %v434 = vld [vmem:[#allocation8 + $0x34] sm:$0xf]
    %v435 = vld [vmem:[#allocation8 + $0x38] sm:$0xf]
    %v436 = vld [vmem:[#allocation8 + $0x3c] sm:$0xf]
    %v437 = vld [vmem:[#allocation8 + $0x40] sm:$0xf]
    %v438 = vld [vmem:[#allocation8 + $0x44] sm:$0xf]
    %v439 = vld [vmem:[#allocation8 + $0x48] sm:$0xf]
    %v440 = vld [vmem:[#allocation8 + $0x4c] sm:$0xf]
    %v441 = vld [vmem:[#allocation8 + $0x50] sm:$0xf]
    %v442 = vld [vmem:[#allocation8 + $0x54] sm:$0xf]
    %v443 = vld [vmem:[#allocation8 + $0x58] sm:$0xf]
    %v444 = vld [vmem:[#allocation8 + $0x5c] sm:$0xf]
    %v445 = vld [vmem:[#allocation8 + $0x60] sm:$0xf]
    %v446 = vld [vmem:[#allocation8 + $0x64] sm:$0xf]
    %v447 = vld [vmem:[#allocation8 + $0x68] sm:$0xf]
    %v448 = vld [vmem:[#allocation8 + $0x6c] sm:$0xf]
    %v449 = vld [vmem:[#allocation8 + $0x70] sm:$0xf]
    %v450 = vld [vmem:[#allocation8 + $0x74] sm:$0xf]
    %v451 = vld [vmem:[#allocation8 + $0x78] sm:$0xf]
    %v452 = vld [vmem:[#allocation8 + $0x7c] sm:$0xf]
    %v453 = vld [vmem:[%s6] sm:$0x1]
    %v454 = vpack.c.bf16 %v419, %v419
    %v455 = vpack.c.bf16 %v420, %v420
    %v457 = vlaneseq
    %v458 = vshrl.u32 %v457, 7
    %v459 = vsub.s32 0, %v458
    %v460 = vrot.slane %v453, %v459
    %v494 = vunpack.c.l.b16 %v421
    %v495 = vunpack.c.l.b16 %v422
    %v496 = vunpack.c.l.b16 %v423
    %v497 = vunpack.c.l.b16 %v424
    %v498 = vunpack.c.l.b16 %v425
    %v499 = vunpack.c.l.b16 %v426
    %v500 = vunpack.c.l.b16 %v427
    %v501 = vunpack.c.l.b16 %v428
    %v502 = vunpack.c.l.b16 %v429
    %v503 = vunpack.c.l.b16 %v430
    %v504 = vunpack.c.l.b16 %v431
    %v505 = vunpack.c.l.b16 %v432
    %v506 = vunpack.c.l.b16 %v433
    %v507 = vunpack.c.l.b16 %v434
    %v508 = vunpack.c.l.b16 %v435
    %v509 = vunpack.c.l.b16 %v436
    %v510 = vunpack.c.l.b16 %v437
    %v511 = vunpack.c.l.b16 %v438
    %v512 = vunpack.c.l.b16 %v439
    %v513 = vunpack.c.l.b16 %v440
    %v514 = vunpack.c.l.b16 %v441
    %v515 = vunpack.c.l.b16 %v442
    %v516 = vunpack.c.l.b16 %v443
    %v517 = vunpack.c.l.b16 %v444
    %v518 = vunpack.c.l.b16 %v445
    %v519 = vunpack.c.l.b16 %v446
    %v520 = vunpack.c.l.b16 %v447
    %v521 = vunpack.c.l.b16 %v448
    %v522 = vunpack.c.l.b16 %v449
    %v523 = vunpack.c.l.b16 %v450
    %v524 = vunpack.c.l.b16 %v451
    %v525 = vunpack.c.l.b16 %v452
    %v526 = vpack.c.b16 %v495, %v494
    %v527 = vpack.c.b16 %v497, %v496
    %v528 = vpack.c.b16 %v499, %v498
    %v529 = vpack.c.b16 %v501, %v500
    %v530 = vpack.c.b16 %v503, %v502
    %v531 = vpack.c.b16 %v505, %v504
    %v532 = vpack.c.b16 %v507, %v506
    %v533 = vpack.c.b16 %v509, %v508
    %v534 = vpack.c.b16 %v511, %v510
    %v535 = vpack.c.b16 %v513, %v512
    %v536 = vpack.c.b16 %v515, %v514
    %v537 = vpack.c.b16 %v517, %v516
    %v538 = vpack.c.b16 %v519, %v518
    %v539 = vpack.c.b16 %v521, %v520
    %v540 = vpack.c.b16 %v523, %v522
    %v541 = vpack.c.b16 %v525, %v524
    %558 = vmatprep.subr.bf16.mxu0 0
    %559 = vmatpush1.bf16.msra.mxu0 %v526
    %560 = vmatprep.subr.bf16.mxu0 0
    %561 = vmatpush1.bf16.msra.mxu0 %v527
    %562 = vmatprep.subr.bf16.mxu0 0
    %563 = vmatpush1.bf16.msra.mxu0 %v528
    %564 = vmatprep.subr.bf16.mxu0 0
    %565 = vmatpush1.bf16.msra.mxu0 %v529
    %566 = vmatprep.subr.bf16.mxu0 0
    %567 = vmatpush1.bf16.msra.mxu0 %v530
    %568 = vmatprep.subr.bf16.mxu0 0
    %569 = vmatpush1.bf16.msra.mxu0 %v531
    %570 = vmatprep.subr.bf16.mxu0 0
    %571 = vmatpush1.bf16.msra.mxu0 %v532
    %572 = vmatprep.subr.bf16.mxu0 0
    %573 = vmatpush1.bf16.msra.mxu0 %v533
    %574 = vmatprep.subr.bf16.mxu0 0
    %575 = vmatpush1.bf16.msra.mxu0 %v534
    %576 = vmatprep.subr.bf16.mxu0 0
    %577 = vmatpush1.bf16.msra.mxu0 %v535
    %578 = vmatprep.subr.bf16.mxu0 0
    %579 = vmatpush1.bf16.msra.mxu0 %v536
    %580 = vmatprep.subr.bf16.mxu0 0
    %581 = vmatpush1.bf16.msra.mxu0 %v537
    %582 = vmatprep.subr.bf16.mxu0 0
    %583 = vmatpush1.bf16.msra.mxu0 %v538
    %584 = vmatprep.subr.bf16.mxu0 0
    %585 = vmatpush1.bf16.msra.mxu0 %v539
    %586 = vmatprep.subr.bf16.mxu0 0
    %587 = vmatpush1.bf16.msra.mxu0 %v540
    %588 = vmatprep.subr.bf16.mxu0 0
    %589 = vmatpush1.bf16.msra.mxu0 %v541
    %590 = vmatprep.mubr.bf16.mxu0 %v455
    %591 = vmatmul.mubr.bf16.gmra.mrb[0].mxu0 %v454
    %v592 = vpop.f32.mrb[0].mxu0
    %v593 = vadd.f32 %v460, %v592
    %v594 = vpop.f32.mrb[0].mxu0
    %v595 = vpop.f32.mrb[0].mxu0
    %v596 = vpop.f32.mrb[0].mxu0
    %597 = vdwg.mxu0
    %v598 = vmax.f32 %v593, 0.0
    %v599 = vld [vmem:[#allocation10] sm:$0xf]
    %v600 = vld [vmem:[#allocation10 + $0x4] sm:$0xf]
    %v601 = vld [vmem:[#allocation10 + $0x8] sm:$0xf]
    %v602 = vld [vmem:[#allocation10 + $0xc] sm:$0xf]
    %v603 = vld [vmem:[#allocation10 + $0x10] sm:$0xf]
    %v604 = vld [vmem:[#allocation10 + $0x14] sm:$0xf]
    %v605 = vld [vmem:[#allocation10 + $0x18] sm:$0xf]
    %v606 = vld [vmem:[#allocation10 + $0x1c] sm:$0xf]
    %v607 = vld [vmem:[#allocation10 + $0x20] sm:$0xf]
    %v608 = vld [vmem:[#allocation10 + $0x24] sm:$0xf]
    %v609 = vld [vmem:[#allocation10 + $0x28] sm:$0xf]
    %v610 = vld [vmem:[#allocation10 + $0x2c] sm:$0xf]
    %v611 = vld [vmem:[#allocation10 + $0x30] sm:$0xf]
    %v612 = vld [vmem:[#allocation10 + $0x34] sm:$0xf]
    %v613 = vld [vmem:[#allocation10 + $0x38] sm:$0xf]
    %v614 = vld [vmem:[#allocation10 + $0x3c] sm:$0xf]
    %v615 = vld [vmem:[%s8] sm:$0x1]
    %v616 = vpack.c.bf16 %v598, %v598
    %v618 = vlaneseq
    %v619 = vshrl.u32 %v618, 7
    %v620 = vsub.s32 0, %v619
    %v621 = vrot.slane %v615, %v620
    %v639 = vunpack.c.l.b16 %v599
    %v640 = vunpack.c.l.b16 %v600
    %v641 = vunpack.c.l.b16 %v601
    %v642 = vunpack.c.l.b16 %v602
    %v643 = vunpack.c.l.b16 %v603
    %v644 = vunpack.c.l.b16 %v604
    %v645 = vunpack.c.l.b16 %v605
    %v646 = vunpack.c.l.b16 %v606
    %v647 = vunpack.c.l.b16 %v607
    %v648 = vunpack.c.l.b16 %v608
    %v649 = vunpack.c.l.b16 %v609
    %v650 = vunpack.c.l.b16 %v610
    %v651 = vunpack.c.l.b16 %v611
    %v652 = vunpack.c.l.b16 %v612
    %v653 = vunpack.c.l.b16 %v613
    %v654 = vunpack.c.l.b16 %v614
    %v655 = vpack.c.b16 %v640, %v639
    %v656 = vpack.c.b16 %v642, %v641
    %v657 = vpack.c.b16 %v644, %v643
    %v658 = vpack.c.b16 %v646, %v645
    %v659 = vpack.c.b16 %v648, %v647
    %v660 = vpack.c.b16 %v650, %v649
    %v661 = vpack.c.b16 %v652, %v651
    %v662 = vpack.c.b16 %v654, %v653
    %671 = vmatprep.subr.bf16.mxu0 0
    %672 = vmatpush1.bf16.msra.mxu0 %v655
    %673 = vmatprep.subr.bf16.mxu0 0
    %674 = vmatpush1.bf16.msra.mxu0 %v656
    %675 = vmatprep.subr.bf16.mxu0 0
    %676 = vmatpush1.bf16.msra.mxu0 %v657
    %677 = vmatprep.subr.bf16.mxu0 0
    %678 = vmatpush1.bf16.msra.mxu0 %v658
    %679 = vmatprep.subr.bf16.mxu0 0
    %680 = vmatpush1.bf16.msra.mxu0 %v659
    %681 = vmatprep.subr.bf16.mxu0 0
    %682 = vmatpush1.bf16.msra.mxu0 %v660
    %683 = vmatprep.subr.bf16.mxu0 0
    %684 = vmatpush1.bf16.msra.mxu0 %v661
    %685 = vmatprep.subr.bf16.mxu0 0
    %686 = vmatpush1.bf16.msra.mxu0 %v662
    %687 = vmatprep.subr.bf16.mxu0 0
    %688 = vmatpush1.bf16.msra.mxu0 0
    %689 = vmatprep.subr.bf16.mxu0 0
    %690 = vmatpush1.bf16.msra.mxu0 0
    %691 = vmatprep.subr.bf16.mxu0 0
    %692 = vmatpush1.bf16.msra.mxu0 0
    %693 = vmatprep.subr.bf16.mxu0 0
    %694 = vmatpush1.bf16.msra.mxu0 0
    %695 = vmatprep.subr.bf16.mxu0 0
    %696 = vmatpush1.bf16.msra.mxu0 0
    %697 = vmatprep.subr.bf16.mxu0 0
    %698 = vmatpush1.bf16.msra.mxu0 0
    %699 = vmatprep.subr.bf16.mxu0 0
    %700 = vmatpush1.bf16.msra.mxu0 0
    %701 = vmatprep.subr.bf16.mxu0 0
    %702 = vmatpush1.bf16.msra.mxu0 0
    %703 = vmatprep.mubr.bf16.mxu0 0
    %704 = vmatmul.mubr.bf16.gmra.mrb[0].mxu0 %v616
    %v705 = vpop.f32.mrb[0].mxu0
    %v706 = vadd.f32 %v621, %v705
    %v707 = vpop.f32.mrb[0].mxu0
    %v708 = vpop.f32.mrb[0].mxu0
    %v709 = vpop.f32.mrb[0].mxu0
    %710 = vdwg.mxu0
    %v711 = vpack.c.bf16 %v706, %v706
    %712 = vst [vmem:[#allocation11] sm:$0xf] %v711
    // Predicated region
    $region58: #{tpu_custom_call.1} parent=1 // pred_check
      _
    $region59: #{tpu_custom_call.1} parent=1 // pred_check_branch
      %714 = sbr.rel (0) target = $region61
    $region60: #{tpu_custom_call.1} parent=1 // pred_region
      %s716 = ssub.s32 64, 64
      %717 = vsyncadd [#allocation4], %s716
      %s719 = sshll.u32 [#allocation11], 4
      %s720 = int_to_ptr.vmem [resolvable:$true] %s719
      %722 = dma.vmem_to_hbm [thread:$0]  %s720, 64, %s9, [#allocation4]
    $region61: #{tpu_custom_call.1} parent=1 // pred_fallthru
      _
    // Predicated region
    $region62: #{tpu_custom_call.1} parent=1 // pred_check
      _
    $region63: #{tpu_custom_call.1} parent=1 // pred_check_branch
      %724 = sbr.rel (0) target = $region65
    $region64: #{tpu_custom_call.1} parent=1 // pred_region
      %725 = dma.done [#allocation4], 64
    $region65: #{tpu_custom_call.1} parent=1 // pred_fallthru
      _
    %726 = vsyncpa [#allocation3], 1
    %727 = vsyncpa [#allocation6], 1
    %728 = vsyncpa [#allocation9], 1
    %729 = vsyncpa [#allocation4], 1

</llo_original>
